<compile_context>
chip_gen: v7x
topology: tpu7x:2x2x1
jax: 0.10.0
libtpu: 0.0.40
codegen_flags: <defaults>
</compile_context>

<pallas_src>
import functools

import numpy as np
import jax
import jax.numpy as jnp
from jax.experimental import pallas as pl


# ------------------------- HiPPO-LegS matrices (host, one-time) -------------------------

def make_legs_AB(N: int):
    A = np.zeros((N, N), dtype=np.float64)
    for i in range(N):
        for j in range(N):
            if i > j:
                A[i, j] = np.sqrt(2 * i + 1) * np.sqrt(2 * j + 1)
            elif i == j:
                A[i, j] = i + 1
    A = -A
    B = np.sqrt(2 * np.arange(N, dtype=np.float64) + 1).reshape(N, 1)
    return A, B


def precompute_gbt(N: int, maxlength: int, gbt_alpha: float):
    """GBT-discretized (A_t, B_t) for t = 0..maxlength-1 (dt = 1/(t+1)), float64."""
    A, B = make_legs_AB(N)
    I = np.eye(N)
    GA = np.zeros((maxlength, N, N), dtype=np.float64)
    GB = np.zeros((maxlength, 1, N), dtype=np.float64)
    for t in range(maxlength):
        dt = 1.0 / (t + 1)
        lhs_inv = np.linalg.inv(I - dt * gbt_alpha * A)
        GA[t] = lhs_inv @ (I + dt * (1.0 - gbt_alpha) * A)
        GB[t] = (lhs_inv @ (dt * B)).reshape(1, N)
    return GA, GB


def fold_recurrence(GA: np.ndarray, GB: np.ndarray) -> np.ndarray:
    """K[t] = GB[t] @ GA[t+1]^T @ ... @ GA[T-1]^T  so that, with zero init,
       c_T = sum_t f_t * K[t] = f(B, T) @ K(T, N).   (float64 host precompute)"""
    T, N, _ = GA.shape
    K = np.zeros((T, N), dtype=np.float64)
    M = np.eye(N)                      # running product GA[t+1]^T ... GA[T-1]^T
    for t in range(T - 1, -1, -1):
        K[t] = GB[t].reshape(N) @ M
        M = GA[t].T @ M
    return K


def make_hippo_params(GA: np.ndarray, GB: np.ndarray, fc_w, fc_b):
    """One-time, input-independent precompute: fold recurrence + fc into KW, pad bias.

    Returns (KW_pad (T, Op) f32, b_pad (1, Op) f32, O).
    NOTE: KW is baked for this exact T and dt schedule with c_0 = 0; regenerate for
    a different sequence length / streaming offset / nonzero initial state."""
    K = fold_recurrence(GA, GB)                           # (T, N) float64
    W = np.asarray(fc_w, dtype=np.float64)                # (O, N)
    b = np.asarray(fc_b, dtype=np.float64).reshape(1, -1) # (1, O)
    T = K.shape[0]
    O = W.shape[0]
    Op = ((O + 127) // 128) * 128                         # lane-dense output width

    KW = K @ W.T                                          # (T, O) float64
    KW_pad = np.zeros((T, Op), dtype=np.float32)
    KW_pad[:, :O] = KW
    b_pad = np.zeros((1, Op), dtype=np.float32)
    b_pad[:, :O] = b
    return jnp.asarray(KW_pad), jnp.asarray(b_pad), O


# ------------------------------- Pallas kernel -------------------------------

def hippo_kernel(f_ref, kw_ref, b_ref, out_ref):
    # f_ref: (B, T)   kw_ref: (T, Op)   b_ref: (1, Op)   out_ref: (B, Op)
    # Single MXU pass: out = f @ KW + bias  (fc already folded into KW on the host).
    out_ref[...] = (
        jnp.dot(f_ref[...], kw_ref[...], preferred_element_type=jnp.float32)
        + b_ref[...]
    ).astype(out_ref.dtype)


@functools.partial(jax.jit, static_argnums=(3,))
def _hippo_forward_jit(inputs, KW_pad, b_pad, O):
    T, B, _ = inputs.shape
    Op = KW_pad.shape[1]
    # (T, B, 1) -> (T, B) is a pure bitcast; the (T, B) -> (B, T) transpose is
    # 16 elements and fuses inside this jit (review-sanctioned alternative).
    f = inputs.reshape(T, B).T                            # (B, T)

    out_pad = pl.pallas_call(
        hippo_kernel,
        out_shape=jax.ShapeDtypeStruct((B, Op), jnp.float32),
    )(f, KW_pad, b_pad)

    return out_pad[:, :O]


def hippo_forward(inputs, KW_pad, b_pad, O):
    """inputs: (T, B, 1). Returns (out (B, O), rec=None) like the PyTorch forward."""
    out = _hippo_forward_jit(inputs, KW_pad, b_pad, O)
    # TODO(synk): nonzero initial c_t and the reconstruction path (reconst=True) are
    # not exercised by the default forward; rec=None matches reconst=False.
    return out, None


# ----------------------------- pure-JAX reference -----------------------------

def hippo_reference(inputs, gbt_A, gbt_B, fc_w, fc_b):
    """Sequential (un-folded) recurrence + Linear, mirroring the PyTorch loop."""
    B = inputs.shape[1]
    N = gbt_A.shape[-1]
    c = jnp.zeros((B, N), jnp.float32)

    def step(c, xs):
        f_t, A_t, B_t = xs
        c = c @ A_t.T + f_t * B_t
        return c, None

    c, _ = jax.lax.scan(step, c, (inputs, gbt_A, gbt_B))
    return c @ fc_w.T + fc_b


# ----------------------------------- main -------------------------------------

if __name__ == "__main__":
    N = 32
    T = 8            # sequence length (== maxlength used for the precompute here)
    Bsz = 2
    output_size = 10
    gbt_alpha = 0.5

    key = jax.random.PRNGKey(0)
    k_in, k_w, k_b = jax.random.split(key, 3)

    # inputs: (seq, batch, 1) matching `for t, f_t in enumerate(inputs)`
    inputs = jax.random.normal(k_in, (T, Bsz, 1), dtype=jnp.float32)

    # deterministic Linear(N, output_size) init (PyTorch-style uniform bounds)
    bound = 1.0 / np.sqrt(N)
    fc_w = jax.random.uniform(k_w, (output_size, N), jnp.float32, -bound, bound)
    fc_b = jax.random.uniform(k_b, (1, output_size), jnp.float32, -bound, bound)

    # One-time, input-independent precompute (GBT matrices, folded recurrence + fc).
    GA64, GB64 = precompute_gbt(N, T, gbt_alpha)
    KW_pad, b_pad, O = make_hippo_params(GA64, GB64, np.asarray(fc_w), np.asarray(fc_b))

    out, rec = hippo_forward(inputs, KW_pad, b_pad, O)
    out = jax.block_until_ready(out)

    # Validate against the sequential float32 recurrence.
    gbt_A = jnp.asarray(GA64.astype(np.float32))
    gbt_B = jnp.asarray(GB64.astype(np.float32))
    ref = jax.block_until_ready(hippo_reference(inputs, gbt_A, gbt_B, fc_w, fc_b))
    np.testing.assert_allclose(np.asarray(out), np.asarray(ref), rtol=1e-4, atol=1e-4)

    print("KERNEL_OK")
</pallas_src>

<mosaic_0001>
module attributes {stable_mosaic.version = 11 : i64} {
  func.func @hippo_kernel(%arg0: memref<2x8xf32, #tpu.memory_space<vmem>>, %arg1: memref<8x128xf32, #tpu.memory_space<vmem>>, %arg2: memref<1x128xf32, #tpu.memory_space<vmem>>, %arg3: memref<2x128xf32, #tpu.memory_space<vmem>>) attributes {dimension_semantics = [], scalar_prefetch = 0 : i64, scratch_operands = 0 : i64, tpu.core_type = #tpu.core_type<tc>} {
    %c0 = arith.constant 0 : index
    %c0_0 = arith.constant 0 : index
    %0 = vector.load %arg0[%c0, %c0_0] : memref<2x8xf32, #tpu.memory_space<vmem>>, vector<2x8xf32>
    %c0_1 = arith.constant 0 : index
    %c0_2 = arith.constant 0 : index
    %1 = vector.load %arg1[%c0_1, %c0_2] : memref<8x128xf32, #tpu.memory_space<vmem>>, vector<8x128xf32>
    %cst = arith.constant dense<0.000000e+00> : vector<2x128xf32>
    %2 = tpu.matmul %0, %1, %cst {dimension_numbers = #tpu.dot_dimension_numbers<[1], [0], [0], [1], [0, 0, 1, 1], [], []>} : vector<2x8xf32>, vector<8x128xf32>, vector<2x128xf32> -> vector<2x128xf32>
    %c0_3 = arith.constant 0 : index
    %c0_4 = arith.constant 0 : index
    %3 = vector.load %arg2[%c0_3, %c0_4] : memref<1x128xf32, #tpu.memory_space<vmem>>, vector<1x128xf32>
    %4 = vector.broadcast %3 : vector<1x128xf32> to vector<2x128xf32>
    %5 = arith.addf %2, %4 : vector<2x128xf32>
    %c0_5 = arith.constant 0 : index
    %c0_6 = arith.constant 0 : index
    %6 = vector.load %arg3[%c0_5, %c0_6] : memref<2x128xf32, #tpu.memory_space<vmem>>, vector<2x128xf32>
    tpu.vector_store %arg3[%c0_5, %c0_6], %5 {strides = array<i32>} : memref<2x128xf32, #tpu.memory_space<vmem>>, vector<2x128xf32>,
    return
  }
}

</mosaic_0001>

<llo_original>
// kernel: _hippo_forward_jit.1
$region0: #{_hippo_forward_jit.1}
  #allocation0 [shape = 'u32[]', space=smem, size = 0x4, offset = 0x4, fixed_abs, tag = 'smem constant byte address 0x4 - core index']
  #allocation1 [shape = 'u32[144,128]{1,0:T(1,128)}', space=vmem, size = 0x12000, scoped, tag = 'internal scratch']
  %s0 = inlined_call_operand.vmem [shape: f32[2,8], index: 0, kind: input, shape index: {}]
  %s1 = inlined_call_operand.hbm [shape: f32[8,128], index: 1, kind: input, shape index: {}]
  %s2 = inlined_call_operand.vmem [shape: f32[1,128], index: 2, kind: input, shape index: {}]
  %s3 = inlined_call_operand.hbm [shape: f32[2,128], index: 3, kind: output, shape index: {}]
  %s4 = sld [smem:[#allocation0]]
  $region26: #{_hippo_forward_jit.1} parent=0
    _
  %s6 = ssub.s32 1, %s4
  %s7 = scalar_select 0, %s6, %s4
  $region1: #{_hippo_forward_jit.1} parent=0
    #allocation2 [shape = 'u8[4096]{0}', space=vmem, size = 0x1000, scoped, tag = 'input window, operand 1, single buffered']
    #allocation3 [shape = 's32[1]{0}', space=sflag, size = 0x4, scoped, tag = 'scoped memory for _hippo_forward_jit.1']
    #allocation4 [shape = 's32[1]{0}', space=sflag, size = 0x4, scoped, tag = 'scoped memory for _hippo_forward_jit.1']
    #allocation5 [shape = 'u8[1024]{0}', space=vmem, size = 0x400, scoped, tag = 'output window, operand 0, single buffered']
    %8 = vsyncpa [#allocation3], 0
    %9 = vsyncpa [#allocation4], 0
    // Predicated region
    $region2: #{_hippo_forward_jit.1} parent=1 // pred_check
      _
    $region3: #{_hippo_forward_jit.1} parent=1 // pred_check_branch
      %11 = sbr.rel (0) target = $region5
    $region4: #{_hippo_forward_jit.1} parent=1 // pred_region
      _
    $region5: #{_hippo_forward_jit.1} parent=1 // pred_fallthru
      _
    // Predicated region
    $region6: #{_hippo_forward_jit.1} parent=1 // pred_check
      _
    $region7: #{_hippo_forward_jit.1} parent=1 // pred_check_branch
      %13 = sbr.rel (0) target = $region9
    $region8: #{_hippo_forward_jit.1} parent=1 // pred_region
      %s15 = ssub.s32 128, 128
      %16 = vsyncadd [#allocation3], %s15
      %s18 = sshll.u32 [#allocation2], 4
      %s19 = int_to_ptr.vmem [resolvable:$true] %s18
      %21 = dma.hbm_to_vmem [thread:$0]  %s1, 128, %s19, [#allocation3]
    $region9: #{_hippo_forward_jit.1} parent=1 // pred_fallthru
      _
    // Predicated region
    $region10: #{_hippo_forward_jit.1} parent=1 // pred_check
      _
    $region11: #{_hippo_forward_jit.1} parent=1 // pred_check_branch
      %23 = sbr.rel (0) target = $region13
    $region12: #{_hippo_forward_jit.1} parent=1 // pred_region
      _
    $region13: #{_hippo_forward_jit.1} parent=1 // pred_fallthru
      _
    // Predicated region
    $region14: #{_hippo_forward_jit.1} parent=1 // pred_check
      _
    $region15: #{_hippo_forward_jit.1} parent=1 // pred_check_branch
      %25 = sbr.rel (0) target = $region17
    $region16: #{_hippo_forward_jit.1} parent=1 // pred_region
      %26 = dma.done [#allocation3], 128
    $region17: #{_hippo_forward_jit.1} parent=1 // pred_fallthru
      _
    %v27 = vld [vmem:[%s0] sm:$0x3]
    %v28 = vld [vmem:[#allocation2] sm:$0xff]
    %v29 = vld [vmem:[%s2] sm:$0x1]
    %v31 = vlaneseq
    %v32 = vshrl.u32 %v31, 7
    %v33 = vsub.s32 0, %v32
    %v34 = vrot.slane %v29, %v33
    %vm36 = vcmask 64512
    %v38 = vsel %vm36, %v27, 0
    %40 = vmatprep.subr.mxu0 0.0
    %41 = vmatpush1.msra.mxu0 %v28
    %42 = vmatprep.subr.mxu0 0.0
    %43 = vmatpush1.msra.mxu0 0.0
    %44 = vmatprep.subr.mxu0 0.0
    %45 = vmatpush1.msra.mxu0 0.0
    %46 = vmatprep.subr.mxu0 0.0
    %47 = vmatpush1.msra.mxu0 0.0
    %48 = vmatprep.subr.mxu0 0.0
    %49 = vmatpush1.msra.mxu0 0.0
    %50 = vmatprep.subr.mxu0 0.0
    %51 = vmatpush1.msra.mxu0 0.0
    %52 = vmatprep.subr.mxu0 0.0
    %53 = vmatpush1.msra.mxu0 0.0
    %54 = vmatprep.subr.mxu0 0.0
    %55 = vmatpush1.msra.mxu0 0.0
    %56 = vmatprep.subr.mxu0 0.0
    %57 = vmatpush1.msra.mxu0 0.0
    %58 = vmatprep.subr.mxu0 0.0
    %59 = vmatpush1.msra.mxu0 0.0
    %60 = vmatprep.subr.mxu0 0.0
    %61 = vmatpush1.msra.mxu0 0.0
    %62 = vmatprep.subr.mxu0 0.0
    %63 = vmatpush1.msra.mxu0 0.0
    %64 = vmatprep.subr.mxu0 0.0
    %65 = vmatpush1.msra.mxu0 0.0
    %66 = vmatprep.subr.mxu0 0.0
    %67 = vmatpush1.msra.mxu0 0.0
    %68 = vmatprep.subr.mxu0 0.0
    %69 = vmatpush1.msra.mxu0 0.0
    %70 = vmatprep.subr.mxu0 0.0
    %71 = vmatpush1.msra.mxu0 0.0
    %72 = vmatprep.subr.mxu0 0.0
    %73 = vmatpush1.msra.mxu0 0.0
    %74 = vmatprep.subr.mxu0 0.0
    %75 = vmatpush1.msra.mxu0 0.0
    %76 = vmatprep.subr.mxu0 0.0
    %77 = vmatpush1.msra.mxu0 0.0
    %78 = vmatprep.subr.mxu0 0.0
    %79 = vmatpush1.msra.mxu0 0.0
    %80 = vmatprep.subr.mxu0 0.0
    %81 = vmatpush1.msra.mxu0 0.0
    %82 = vmatprep.subr.mxu0 0.0
    %83 = vmatpush1.msra.mxu0 0.0
    %84 = vmatprep.subr.mxu0 0.0
    %85 = vmatpush1.msra.mxu0 0.0
    %86 = vmatprep.subr.mxu0 0.0
    %87 = vmatpush1.msra.mxu0 0.0
    %88 = vmatprep.subr.mxu0 0.0
    %89 = vmatpush1.msra.mxu0 0.0
    %90 = vmatprep.subr.mxu0 0.0
    %91 = vmatpush1.msra.mxu0 0.0
    %92 = vmatprep.subr.mxu0 0.0
    %93 = vmatpush1.msra.mxu0 0.0
    %94 = vmatprep.subr.mxu0 0.0
    %95 = vmatpush1.msra.mxu0 0.0
    %96 = vmatprep.subr.mxu0 0.0
    %97 = vmatpush1.msra.mxu0 0.0
    %98 = vmatprep.subr.mxu0 0.0
    %99 = vmatpush1.msra.mxu0 0.0
    %100 = vmatprep.subr.mxu0 0.0
    %101 = vmatpush1.msra.mxu0 0.0
    %102 = vmatprep.subr.mxu0 0.0
    %103 = vmatpush1.msra.mxu0 0.0
    %104 = vmatprep.mubr.f32.mxu0 0.0
    %105 = vmatmul.mubr.f32.gmra.mrb[0].mxu0 %v38
    %v106 = vpop.f32.mrb[0].mxu0
    %v107 = vadd.f32 %v34, %v106
    %v108 = vpop.f32.mrb[0].mxu0
    %109 = vdwg.mxu0
    %110 = vst [vmem:[#allocation5] sm:$0x3] %v107
    // Predicated region
    $region18: #{_hippo_forward_jit.1} parent=1 // pred_check
      _
    $region19: #{_hippo_forward_jit.1} parent=1 // pred_check_branch
      %112 = sbr.rel (0) target = $region21
    $region20: #{_hippo_forward_jit.1} parent=1 // pred_region
      %s114 = ssub.s32 32, 32
      %115 = vsyncadd [#allocation4], %s114
      %s117 = sshll.u32 [#allocation5], 4
      %s118 = int_to_ptr.vmem [resolvable:$true] %s117
      %120 = dma.vmem_to_hbm [thread:$0]  %s118, 32, %s3, [#allocation4]
    $region21: #{_hippo_forward_jit.1} parent=1 // pred_fallthru
      _
    // Predicated region
    $region22: #{_hippo_forward_jit.1} parent=1 // pred_check
      _
    $region23: #{_hippo_forward_jit.1} parent=1 // pred_check_branch
      %122 = sbr.rel (0) target = $region25
    $region24: #{_hippo_forward_jit.1} parent=1 // pred_region
      %123 = dma.done [#allocation4], 32
    $region25: #{_hippo_forward_jit.1} parent=1 // pred_fallthru
      _
    %124 = vsyncpa [#allocation3], 1
    %125 = vsyncpa [#allocation4], 1

</llo_original>
